<compile_context>
chip_gen: v5e
topology: v5e:2x2
jax: 0.10.0
libtpu: 0.0.40
codegen_flags: <defaults>
</compile_context>

<pallas_src>
import functools

import jax
import jax.numpy as jnp
from jax.experimental import pallas as pl
from jax.experimental.pallas import tpu as pltpu

HIDDEN = 128
HEAD_PAD = 8       # padded head lanes: [q0, q1, v, 0, 0, 0, 0, 0]
TB_MAX = 2048      # max batch-tile rows per grid step
SPLIT_ROWS = 256   # if a single tile would hold >= this many rows, split in 2
                   # so v7x's two TensorCores each take half the batch.


def _round_up(n, m):
    return ((n + m - 1) // m) * m


def _cdiv(a, b):
    return -(-a // b)


def _qnet_kernel(x_ref, w1_ref, w23_ref, wh_ref, b_ref, out_ref, *, duel):
    # ---- layer 1: (TB,4) @ (4,128) as 4 unrolled VPU FMAs (K=4 wastes the MXU)
    x = x_ref[...]                                    # (TB, 4)  f32
    w1 = w1_ref[...]                                  # (4, 128) f32
    h = (b_ref[0:1, :]
         + x[:, 0:1] * w1[0:1, :]
         + x[:, 1:2] * w1[1:2, :]
         + x[:, 2:3] * w1[2:3, :]
         + x[:, 3:4] * w1[3:4, :])
    h = jnp.maximum(h, 0.0)

    # ---- layers 2/3: bf16 MXU inputs, f32 accumulation (weights stacked (2,128,128))
    h = jnp.maximum(
        jnp.dot(h.astype(jnp.bfloat16), w23_ref[0],
                preferred_element_type=jnp.float32) + b_ref[1:2, :], 0.0)
    h = jnp.maximum(
        jnp.dot(h.astype(jnp.bfloat16), w23_ref[1],
                preferred_element_type=jnp.float32) + b_ref[2:3, :], 0.0)

    # ---- fused head: narrow (128,8) matmul; lanes 0..1 = q, lane 2 = value
    y = jnp.dot(h.astype(jnp.bfloat16), wh_ref[...],
                preferred_element_type=jnp.float32) + b_ref[3:4, 0:HEAD_PAD]

    if duel:
        # NOTE: dueling mean hard-coded to CartPole's 2 actions (per module spec).
        v = y[:, 2:3]                                 # (TB, 1)
        q_mean = 0.5 * (y[:, 0:1] + y[:, 1:2])        # 2-action mean, VPU only
        out_ref[...] = y + v - q_mean                 # lanes 0..1 hold final Q
    else:
        out_ref[...] = y


def pack_params(params, duel=True):
    """One-time packing of raw params into kernel operands.

    Call this once (or whenever params change); do NOT call per forward step.
    """
    if duel:
        w_head = jnp.concatenate([params["w4"], params["wv"]], axis=1)   # (128,3)
        b_head = jnp.concatenate([params["b4"], params["bv"]], axis=1)   # (1,3)
    else:
        w_head = params["w4"]                                            # (128,2)
        b_head = params["b4"]
    w_head = jnp.pad(w_head, ((0, 0), (0, HEAD_PAD - w_head.shape[1])))
    w_head = w_head.astype(jnp.bfloat16)                                 # (128,8)
    b_head = jnp.pad(b_head, ((0, 0), (0, HIDDEN - b_head.shape[1])))    # (1,128)

    bias_stack = jnp.concatenate(
        [params["b1"], params["b2"], params["b3"], b_head], axis=0)      # (4,128)
    bias_stack = bias_stack.astype(jnp.float32)

    w1 = params["w1"].astype(jnp.float32)            # layer 1 stays f32 (VPU path)
    w23 = jnp.stack([params["w2"], params["w3"]], axis=0).astype(jnp.bfloat16)

    return {"w1": w1, "w23": w23, "w_head": w_head, "bias": bias_stack}


@functools.partial(jax.jit, static_argnames=("duel",))
def cartpole_network_forward(x, packed, duel=True):
    """Pallas implementation of CartPoleNetwork.forward.

    x: (B, 4) float32; packed: output of pack_params(). Returns (B, 2) f32 Q.
    """
    batch = x.shape[0]

    # ---- batch tiling: bounded padding (<8 dead rows per tile) ------------
    num_tiles = max(1, _cdiv(batch, TB_MAX))
    if num_tiles == 1 and batch >= SPLIT_ROWS:
        num_tiles = 2          # let v7x's 2nd TensorCore take half the rows
    tb = _round_up(_cdiv(batch, num_tiles), 8)
    b_pad = num_tiles * tb

    x_p = x.astype(jnp.float32)
    if b_pad != batch:
        x_p = jnp.pad(x_p, ((0, b_pad - batch), (0, 0)))

    kernel = functools.partial(_qnet_kernel, duel=duel)

    out = pl.pallas_call(
        kernel,
        out_shape=jax.ShapeDtypeStruct((b_pad, HEAD_PAD), jnp.float32),
        grid=(num_tiles,),
        in_specs=[
            pl.BlockSpec((tb, 4), lambda i: (i, 0)),                 # x (batch-tiled)
            pl.BlockSpec((4, HIDDEN), lambda i: (0, 0)),             # w1 (resident)
            pl.BlockSpec((2, HIDDEN, HIDDEN), lambda i: (0, 0, 0)),  # w2/w3 stack
            pl.BlockSpec((HIDDEN, HEAD_PAD), lambda i: (0, 0)),      # fused head (128,8)
            pl.BlockSpec((4, HIDDEN), lambda i: (0, 0)),             # bias stack
        ],
        out_specs=pl.BlockSpec((tb, HEAD_PAD), lambda i: (i, 0)),
        compiler_params=pltpu.CompilerParams(
            dimension_semantics=("parallel",)),
    )(x_p, packed["w1"], packed["w23"], packed["w_head"], packed["bias"])

    return out[:batch, :2]


def init_params(key):
    """Deterministic parameter init (PyTorch-style uniform(-1/sqrt(fan_in), +))."""
    dims = [("w1", "b1", 4, 128),
            ("w2", "b2", 128, 128),
            ("w3", "b3", 128, 128),
            ("w4", "b4", 128, 2),
            ("wv", "bv", 128, 1)]
    params = {}
    keys = jax.random.split(key, 2 * len(dims))
    for i, (wn, bn, fan_in, fan_out) in enumerate(dims):
        bound = 1.0 / (fan_in ** 0.5)
        params[wn] = jax.random.uniform(
            keys[2 * i], (fan_in, fan_out), jnp.float32, -bound, bound)
        # biases kept 2-D (1, out) so they broadcast over the batch axis
        params[bn] = jax.random.uniform(
            keys[2 * i + 1], (1, fan_out), jnp.float32, -bound, bound)
    return params


def reference_forward(x, params, duel=True, mxu_bf16=False):
    """Pure-JAX reference mirroring the PyTorch module.

    mxu_bf16=True mimics the kernel's numerics (bf16 MXU inputs, f32 accum)
    for a tight-tolerance check; mxu_bf16=False is the plain f32 reference.
    """
    def mm(a, w):
        if mxu_bf16:
            return jnp.dot(a.astype(jnp.bfloat16), w.astype(jnp.bfloat16),
                           preferred_element_type=jnp.float32)
        return jnp.dot(a, w)

    h = jax.nn.relu(x @ params["w1"] + params["b1"])   # layer 1 is f32 in kernel
    h = jax.nn.relu(mm(h, params["w2"]) + params["b2"])
    h = jax.nn.relu(mm(h, params["w3"]) + params["b3"])
    q = mm(h, params["w4"]) + params["b4"]
    if duel:
        v = mm(h, params["wv"]) + params["bv"]
        q = v + (q - jnp.mean(q, axis=1, keepdims=True))
    return q


if __name__ == "__main__":
    key = jax.random.PRNGKey(0)
    pkey, xkey, xkey2 = jax.random.split(key, 3)

    params = init_params(pkey)
    packed_duel = jax.tree_util.tree_map(
        jax.block_until_ready, pack_params(params, duel=True))
    packed_plain = jax.tree_util.tree_map(
        jax.block_until_ready, pack_params(params, duel=False))

    batch = 8
    x = jax.random.normal(xkey, (batch, 4), dtype=jnp.float32)  # CartPole obs dim = 4

    q_duel = jax.block_until_ready(
        cartpole_network_forward(x, packed_duel, duel=True))
    q_plain = jax.block_until_ready(
        cartpole_network_forward(x, packed_plain, duel=False))
    assert q_duel.shape == (batch, 2) and q_plain.shape == (batch, 2)

    # tight check vs a bf16-matmul reference (same numerics as the kernel)
    ref_duel_bf = reference_forward(x, params, duel=True, mxu_bf16=True)
    ref_plain_bf = reference_forward(x, params, duel=False, mxu_bf16=True)
    assert jnp.allclose(q_duel, ref_duel_bf, atol=2e-3, rtol=2e-3)
    assert jnp.allclose(q_plain, ref_plain_bf, atol=2e-3, rtol=2e-3)

    # loose sanity check vs the full-f32 reference (bf16 MXU inputs in kernel)
    ref_duel_f32 = reference_forward(x, params, duel=True, mxu_bf16=False)
    ref_plain_f32 = reference_forward(x, params, duel=False, mxu_bf16=False)
    assert jnp.allclose(q_duel, ref_duel_f32, atol=5e-2, rtol=5e-2)
    assert jnp.allclose(q_plain, ref_plain_f32, atol=5e-2, rtol=5e-2)

    # exercise the ragged / 2-tile (v7x split) path with a modest batch
    batch2 = 260
    x2 = jax.random.normal(xkey2, (batch2, 4), dtype=jnp.float32)
    q2 = jax.block_until_ready(
        cartpole_network_forward(x2, packed_duel, duel=True))
    ref2 = reference_forward(x2, params, duel=True, mxu_bf16=True)
    assert q2.shape == (batch2, 2)
    assert jnp.allclose(q2, ref2, atol=2e-3, rtol=2e-3)

    print("KERNEL_OK")
</pallas_src>

<mosaic_0001>
module attributes {stable_mosaic.version = 11 : i64} {
  func.func @_qnet_kernel(%arg0: i32, %arg1: memref<8x4xf32, #tpu.memory_space<vmem>>, %arg2: memref<4x128xf32, #tpu.memory_space<vmem>>, %arg3: memref<2x128x128xbf16, #tpu.memory_space<vmem>>, %arg4: memref<128x8xbf16, #tpu.memory_space<vmem>>, %arg5: memref<4x128xf32, #tpu.memory_space<vmem>>, %arg6: memref<8x8xf32, #tpu.memory_space<vmem>>) attributes {dimension_semantics = [#tpu.dimension_semantics<parallel>], iteration_bounds = array<i64: 1>, scalar_prefetch = 0 : i64, scratch_operands = 0 : i64, tpu.core_type = #tpu.core_type<tc>, window_params = [{transform_indices = @transform_0, window_bounds = array<i64: 8, 4>}, {pipeline_mode = #tpu.pipeline_mode<synchronous>, transform_indices = @transform_1, window_bounds = array<i64: 4, 128>}, {pipeline_mode = #tpu.pipeline_mode<synchronous>, transform_indices = @transform_2, window_bounds = array<i64: 2, 128, 128>}, {pipeline_mode = #tpu.pipeline_mode<synchronous>, transform_indices = @transform_3, window_bounds = array<i64: 128, 8>}, {pipeline_mode = #tpu.pipeline_mode<synchronous>, transform_indices = @transform_4, window_bounds = array<i64: 4, 128>}, {transform_indices = @transform_5, window_bounds = array<i64: 8, 8>}]} {
    %c0 = arith.constant 0 : index
    %c0_0 = arith.constant 0 : index
    %0 = vector.load %arg1[%c0, %c0_0] : memref<8x4xf32, #tpu.memory_space<vmem>>, vector<8x4xf32>
    %c0_1 = arith.constant 0 : index
    %c0_2 = arith.constant 0 : index
    %1 = vector.load %arg2[%c0_1, %c0_2] : memref<4x128xf32, #tpu.memory_space<vmem>>, vector<4x128xf32>
    %c0_3 = arith.constant 0 : index
    %c0_4 = arith.constant 0 : index
    %2 = vector.load %arg5[%c0_3, %c0_4] : memref<4x128xf32, #tpu.memory_space<vmem>>, vector<1x128xf32>
    %3 = vector.extract_strided_slice %0 {offsets = [0, 0], sizes = [8, 1], strides = [1, 1]} : vector<8x4xf32> to vector<8x1xf32>
    %4 = vector.extract_strided_slice %1 {offsets = [0, 0], sizes = [1, 128], strides = [1, 1]} : vector<4x128xf32> to vector<1x128xf32>
    %5 = vector.broadcast %3 : vector<8x1xf32> to vector<8x128xf32>
    %6 = vector.broadcast %4 : vector<1x128xf32> to vector<8x128xf32>
    %7 = arith.mulf %5, %6 : vector<8x128xf32>
    %8 = vector.broadcast %2 : vector<1x128xf32> to vector<8x128xf32>
    %9 = arith.addf %8, %7 : vector<8x128xf32>
    %10 = vector.extract_strided_slice %0 {offsets = [0, 1], sizes = [8, 1], strides = [1, 1]} : vector<8x4xf32> to vector<8x1xf32>
    %11 = vector.extract_strided_slice %1 {offsets = [1, 0], sizes = [1, 128], strides = [1, 1]} : vector<4x128xf32> to vector<1x128xf32>
    %12 = vector.broadcast %10 : vector<8x1xf32> to vector<8x128xf32>
    %13 = vector.broadcast %11 : vector<1x128xf32> to vector<8x128xf32>
    %14 = arith.mulf %12, %13 : vector<8x128xf32>
    %15 = arith.addf %9, %14 : vector<8x128xf32>
    %16 = vector.extract_strided_slice %0 {offsets = [0, 2], sizes = [8, 1], strides = [1, 1]} : vector<8x4xf32> to vector<8x1xf32>
    %17 = vector.extract_strided_slice %1 {offsets = [2, 0], sizes = [1, 128], strides = [1, 1]} : vector<4x128xf32> to vector<1x128xf32>
    %18 = vector.broadcast %16 : vector<8x1xf32> to vector<8x128xf32>
    %19 = vector.broadcast %17 : vector<1x128xf32> to vector<8x128xf32>
    %20 = arith.mulf %18, %19 : vector<8x128xf32>
    %21 = arith.addf %15, %20 : vector<8x128xf32>
    %22 = vector.extract_strided_slice %0 {offsets = [0, 3], sizes = [8, 1], strides = [1, 1]} : vector<8x4xf32> to vector<8x1xf32>
    %23 = vector.extract_strided_slice %1 {offsets = [3, 0], sizes = [1, 128], strides = [1, 1]} : vector<4x128xf32> to vector<1x128xf32>
    %24 = vector.broadcast %22 : vector<8x1xf32> to vector<8x128xf32>
    %25 = vector.broadcast %23 : vector<1x128xf32> to vector<8x128xf32>
    %26 = arith.mulf %24, %25 : vector<8x128xf32>
    %27 = arith.addf %21, %26 : vector<8x128xf32>
    %cst = arith.constant 0.000000e+00 : f32
    %28 = vector.broadcast %cst : f32 to vector<8x128xf32>
    %29 = arith.maximumf %27, %28 : vector<8x128xf32>
    %30 = arith.truncf %29 : vector<8x128xf32> to vector<8x128xbf16>
    %c0_5 = arith.constant 0 : index
    %c0_6 = arith.constant 0 : index
    %c0_7 = arith.constant 0 : index
    %31 = vector.load %arg3[%c0_5, %c0_6, %c0_7] : memref<2x128x128xbf16, #tpu.memory_space<vmem>>, vector<1x128x128xbf16>
    %32 = vector.shape_cast %31 : vector<1x128x128xbf16> to vector<128x128xbf16>
    %cst_8 = arith.constant dense<0.000000e+00> : vector<8x128xf32>
    %33 = tpu.matmul %30, %32, %cst_8 {dimension_numbers = #tpu.dot_dimension_numbers<[1], [0], [0], [1], [0, 0, 1, 1], [], []>} : vector<8x128xbf16>, vector<128x128xbf16>, vector<8x128xf32> -> vector<8x128xf32>
    %c1 = arith.constant 1 : index
    %c0_9 = arith.constant 0 : index
    %34 = vector.load %arg5[%c1, %c0_9] : memref<4x128xf32, #tpu.memory_space<vmem>>, vector<1x128xf32>
    %35 = vector.broadcast %34 : vector<1x128xf32> to vector<8x128xf32>
    %36 = arith.addf %33, %35 : vector<8x128xf32>
    %cst_10 = arith.constant 0.000000e+00 : f32
    %37 = vector.broadcast %cst_10 : f32 to vector<8x128xf32>
    %38 = arith.maximumf %36, %37 : vector<8x128xf32>
    %39 = arith.truncf %38 : vector<8x128xf32> to vector<8x128xbf16>
    %c1_11 = arith.constant 1 : index
    %c0_12 = arith.constant 0 : index
    %c0_13 = arith.constant 0 : index
    %40 = vector.load %arg3[%c1_11, %c0_12, %c0_13] : memref<2x128x128xbf16, #tpu.memory_space<vmem>>, vector<1x128x128xbf16>
    %41 = vector.shape_cast %40 : vector<1x128x128xbf16> to vector<128x128xbf16>
    %cst_14 = arith.constant dense<0.000000e+00> : vector<8x128xf32>
    %42 = tpu.matmul %39, %41, %cst_14 {dimension_numbers = #tpu.dot_dimension_numbers<[1], [0], [0], [1], [0, 0, 1, 1], [], []>} : vector<8x128xbf16>, vector<128x128xbf16>, vector<8x128xf32> -> vector<8x128xf32>
    %c2 = arith.constant 2 : index
    %c0_15 = arith.constant 0 : index
    %43 = vector.load %arg5[%c2, %c0_15] : memref<4x128xf32, #tpu.memory_space<vmem>>, vector<1x128xf32>
    %44 = vector.broadcast %43 : vector<1x128xf32> to vector<8x128xf32>
    %45 = arith.addf %42, %44 : vector<8x128xf32>
    %cst_16 = arith.constant 0.000000e+00 : f32
    %46 = vector.broadcast %cst_16 : f32 to vector<8x128xf32>
    %47 = arith.maximumf %45, %46 : vector<8x128xf32>
    %48 = arith.truncf %47 : vector<8x128xf32> to vector<8x128xbf16>
    %c0_17 = arith.constant 0 : index
    %c0_18 = arith.constant 0 : index
    %49 = vector.load %arg4[%c0_17, %c0_18] : memref<128x8xbf16, #tpu.memory_space<vmem>>, vector<128x8xbf16>
    %cst_19 = arith.constant dense<0.000000e+00> : vector<8x8xf32>
    %50 = tpu.matmul %48, %49, %cst_19 {dimension_numbers = #tpu.dot_dimension_numbers<[1], [0], [0], [1], [0, 0, 1, 1], [], []>} : vector<8x128xbf16>, vector<128x8xbf16>, vector<8x8xf32> -> vector<8x8xf32>
    %c3 = arith.constant 3 : index
    %c0_20 = arith.constant 0 : index
    %51 = vector.load %arg5[%c3, %c0_20] : memref<4x128xf32, #tpu.memory_space<vmem>>, vector<1x8xf32>
    %52 = vector.broadcast %51 : vector<1x8xf32> to vector<8x8xf32>
    %53 = arith.addf %50, %52 : vector<8x8xf32>
    %54 = vector.extract_strided_slice %53 {offsets = [0, 2], sizes = [8, 1], strides = [1, 1]} : vector<8x8xf32> to vector<8x1xf32>
    %55 = vector.extract_strided_slice %53 {offsets = [0, 0], sizes = [8, 1], strides = [1, 1]} : vector<8x8xf32> to vector<8x1xf32>
    %56 = vector.extract_strided_slice %53 {offsets = [0, 1], sizes = [8, 1], strides = [1, 1]} : vector<8x8xf32> to vector<8x1xf32>
    %57 = arith.addf %55, %56 : vector<8x1xf32>
    %cst_21 = arith.constant 5.000000e-01 : f32
    %58 = vector.broadcast %cst_21 : f32 to vector<8x1xf32>
    %59 = arith.mulf %58, %57 : vector<8x1xf32>
    %60 = vector.broadcast %54 : vector<8x1xf32> to vector<8x8xf32>
    %61 = arith.addf %53, %60 : vector<8x8xf32>
    %62 = vector.broadcast %59 : vector<8x1xf32> to vector<8x8xf32>
    %63 = arith.subf %61, %62 : vector<8x8xf32>
    %c0_22 = arith.constant 0 : index
    %c0_23 = arith.constant 0 : index
    %64 = vector.load %arg6[%c0_22, %c0_23] : memref<8x8xf32, #tpu.memory_space<vmem>>, vector<8x8xf32>
    tpu.vector_store %arg6[%c0_22, %c0_23], %63 {strides = array<i32>} : memref<8x8xf32, #tpu.memory_space<vmem>>, vector<8x8xf32>,
    return
  }
  func.func @transform_0(%arg0: i32) -> (i32, i32) {
    %c0_i32 = arith.constant 0 : i32
    %c0_i32_0 = arith.constant 0 : i32
    return %arg0, %c0_i32 : i32, i32
  }
  func.func @transform_1(%arg0: i32) -> (i32, i32) {
    %c0_i32 = arith.constant 0 : i32
    %c0_i32_0 = arith.constant 0 : i32
    %c0_i32_1 = arith.constant 0 : i32
    return %c0_i32, %c0_i32_0 : i32, i32
  }
  func.func @transform_2(%arg0: i32) -> (i32, i32, i32) {
    %c0_i32 = arith.constant 0 : i32
    %c0_i32_0 = arith.constant 0 : i32
    %c0_i32_1 = arith.constant 0 : i32
    %c0_i32_2 = arith.constant 0 : i32
    return %c0_i32, %c0_i32_0, %c0_i32_1 : i32, i32, i32
  }
  func.func @transform_3(%arg0: i32) -> (i32, i32) {
    %c0_i32 = arith.constant 0 : i32
    %c0_i32_0 = arith.constant 0 : i32
    %c0_i32_1 = arith.constant 0 : i32
    return %c0_i32, %c0_i32_0 : i32, i32
  }
  func.func @transform_4(%arg0: i32) -> (i32, i32) {
    %c0_i32 = arith.constant 0 : i32
    %c0_i32_0 = arith.constant 0 : i32
    %c0_i32_1 = arith.constant 0 : i32
    return %c0_i32, %c0_i32_0 : i32, i32
  }
  func.func @transform_5(%arg0: i32) -> (i32, i32) {
    %c0_i32 = arith.constant 0 : i32
    %c0_i32_0 = arith.constant 0 : i32
    return %arg0, %c0_i32 : i32, i32
  }
}

</mosaic_0001>

<llo_original>
// kernel: cartpole_network_forward.1
$region0: #{cartpole_network_forward.1}
  #allocation0 [shape = 'u32[]', space=smem, size = 0x4, offset = 0x4, fixed_abs, tag = 'smem constant byte address 0x4 - core index']
  #allocation1 [shape = 'u32[72,128]{1,0:T(1,128)}', space=vmem, size = 0x9000, scoped, tag = 'internal scratch']
  %s0 = inlined_call_operand.vmem [shape: f32[8,4], index: 0, kind: input, shape index: {}]
  %s1 = inlined_call_operand.vmem [shape: f32[4,128], index: 1, kind: input, shape index: {}]
  %s2 = inlined_call_operand.hbm [shape: bf16[2,128,128], index: 2, kind: input, shape index: {}]
  %s3 = inlined_call_operand.vmem [shape: bf16[128,8], index: 3, kind: input, shape index: {}]
  %s4 = inlined_call_operand.vmem [shape: f32[4,128], index: 4, kind: input, shape index: {}]
  %s5 = inlined_call_operand.vmem [shape: f32[8,8], index: 5, kind: output, shape index: {}]
  %s6 = sld [smem:[#allocation0]]
  $region34: #{cartpole_network_forward.1} parent=0
    _
  %s8 = ssub.s32 1, %s6
  %s9 = scalar_select 0, %s8, %s6
  $region1: #{cartpole_network_forward.1} parent=0
    #allocation2 [shape = 'u8[65536]{0}', space=vmem, size = 0x10000, scoped, tag = 'input window, operand 2, single buffered']
    #allocation3 [shape = 's32[1]{0}', space=sflag, size = 0x4, scoped, tag = 'scoped memory for cartpole_network_forward.1']
    %10 = vsyncpa [#allocation3], 0
    // Predicated region
    $region2: #{cartpole_network_forward.1} parent=1 // pred_check
      _
    $region3: #{cartpole_network_forward.1} parent=1 // pred_check_branch
      %12 = sbr.rel (0) target = $region5
    $region4: #{cartpole_network_forward.1} parent=1 // pred_region
      _
    $region5: #{cartpole_network_forward.1} parent=1 // pred_fallthru
      _
    // Predicated region
    $region6: #{cartpole_network_forward.1} parent=1 // pred_check
      _
    $region7: #{cartpole_network_forward.1} parent=1 // pred_check_branch
      %14 = sbr.rel (0) target = $region9
    $region8: #{cartpole_network_forward.1} parent=1 // pred_region
      _
    $region9: #{cartpole_network_forward.1} parent=1 // pred_fallthru
      _
    // Predicated region
    $region10: #{cartpole_network_forward.1} parent=1 // pred_check
      _
    $region11: #{cartpole_network_forward.1} parent=1 // pred_check_branch
      %16 = sbr.rel (0) target = $region13
    $region12: #{cartpole_network_forward.1} parent=1 // pred_region
      %18 = vsyncadd [#allocation3], 0
      %s19 = sshll.u32 %s2, 4
      %s20 = int_to_ptr.hbm [resolvable:$true] %s19
      %s21 = sshll.u32 [#allocation2], 4
      %s22 = int_to_ptr.vmem [resolvable:$true] %s21
      %27 = dma.hbm_to_vmem [thread:$0]  %s20, 2048, %s22, [#allocation3], 64, 64, 4
    $region13: #{cartpole_network_forward.1} parent=1 // pred_fallthru
      _
    // Predicated region
    $region14: #{cartpole_network_forward.1} parent=1 // pred_check
      _
    $region15: #{cartpole_network_forward.1} parent=1 // pred_check_branch
      %29 = sbr.rel (0) target = $region17
    $region16: #{cartpole_network_forward.1} parent=1 // pred_region
      _
    $region17: #{cartpole_network_forward.1} parent=1 // pred_fallthru
      _
    // Predicated region
    $region18: #{cartpole_network_forward.1} parent=1 // pred_check
      _
    $region19: #{cartpole_network_forward.1} parent=1 // pred_check_branch
      %31 = sbr.rel (0) target = $region21
    $region20: #{cartpole_network_forward.1} parent=1 // pred_region
      _
    $region21: #{cartpole_network_forward.1} parent=1 // pred_fallthru
      _
    // Predicated region
    $region22: #{cartpole_network_forward.1} parent=1 // pred_check
      _
    $region23: #{cartpole_network_forward.1} parent=1 // pred_check_branch
      %33 = sbr.rel (0) target = $region25
    $region24: #{cartpole_network_forward.1} parent=1 // pred_region
      %35 = dma.done [#allocation3], 2048
    $region25: #{cartpole_network_forward.1} parent=1 // pred_fallthru
      _
    %v36 = vld [vmem:[%s0] sm:$0xff]
    %v37 = vld [vmem:[%s1] sm:$0xf]
    %v38 = vld [vmem:[%s4] sm:$0x1]
    %40 = vset.pattern.permute.xlu0 0
    %41 = vperm.xlu0 %40, %v36
    %v42 = vpop.permute.xlu0 %41
    %v44 = vperm.slane %v37, 0
    %v45 = vmul.f32 %v42, %v44
    %v46 = vperm.slane %v38, 0
    %v47 = vadd.f32 %v46, %v45
    %48 = vset.pattern.permute.xlu0 1
    %49 = vperm.xlu0 %48, %v36
    %v50 = vpop.permute.xlu0 %49
    %v52 = vperm.slane %v37, 1
    %v53 = vmul.f32 %v50, %v52
    %v54 = vadd.f32 %v47, %v53
    %55 = vset.pattern.permute.xlu0 2
    %56 = vperm.xlu0 %55, %v36
    %v57 = vpop.permute.xlu0 %56
    %v59 = vperm.slane %v37, 2
    %v60 = vmul.f32 %v57, %v59
    %v61 = vadd.f32 %v54, %v60
    %62 = vset.pattern.permute.xlu0 3
    %63 = vperm.xlu0 %62, %v36
    %v64 = vpop.permute.xlu0 %63
    %v66 = vperm.slane %v37, 3
    %v67 = vmul.f32 %v64, %v66
    %v68 = vadd.f32 %v61, %v67
    %v69 = vmax.f32 %v68, 0.0
    %v70 = vpack.c.bf16 %v69, %v69
    %v71 = vld [vmem:[#allocation2] sm:$0xf]
    %v72 = vld [vmem:[#allocation2 + $0x4] sm:$0xf]
    %v73 = vld [vmem:[#allocation2 + $0x8] sm:$0xf]
    %v74 = vld [vmem:[#allocation2 + $0xc] sm:$0xf]
    %v75 = vld [vmem:[#allocation2 + $0x10] sm:$0xf]
    %v76 = vld [vmem:[#allocation2 + $0x14] sm:$0xf]
    %v77 = vld [vmem:[#allocation2 + $0x18] sm:$0xf]
    %v78 = vld [vmem:[#allocation2 + $0x1c] sm:$0xf]
    %v79 = vld [vmem:[#allocation2 + $0x20] sm:$0xf]
    %v80 = vld [vmem:[#allocation2 + $0x24] sm:$0xf]
    %v81 = vld [vmem:[#allocation2 + $0x28] sm:$0xf]
    %v82 = vld [vmem:[#allocation2 + $0x2c] sm:$0xf]
    %v83 = vld [vmem:[#allocation2 + $0x30] sm:$0xf]
    %v84 = vld [vmem:[#allocation2 + $0x34] sm:$0xf]
    %v85 = vld [vmem:[#allocation2 + $0x38] sm:$0xf]
    %v86 = vld [vmem:[#allocation2 + $0x3c] sm:$0xf]
    %v87 = vld [vmem:[%s4 + $0x1] sm:$0x1]
    %v88 = vperm.slane %v87, 0
    %v105 = vunpack.c.l.b16 %v71
    %v106 = vunpack.c.l.b16 %v72
    %v107 = vunpack.c.l.b16 %v73
    %v108 = vunpack.c.l.b16 %v74
    %v109 = vunpack.c.l.b16 %v75
    %v110 = vunpack.c.l.b16 %v76
    %v111 = vunpack.c.l.b16 %v77
    %v112 = vunpack.c.l.b16 %v78
    %v113 = vunpack.c.l.b16 %v79
    %v114 = vunpack.c.l.b16 %v80
    %v115 = vunpack.c.l.b16 %v81
    %v116 = vunpack.c.l.b16 %v82
    %v117 = vunpack.c.l.b16 %v83
    %v118 = vunpack.c.l.b16 %v84
    %v119 = vunpack.c.l.b16 %v85
    %v120 = vunpack.c.l.b16 %v86
    %v121 = vpack.c.b16 %v106, %v105
    %v122 = vpack.c.b16 %v108, %v107
    %v123 = vpack.c.b16 %v110, %v109
    %v124 = vpack.c.b16 %v112, %v111
    %v125 = vpack.c.b16 %v114, %v113
    %v126 = vpack.c.b16 %v116, %v115
    %v127 = vpack.c.b16 %v118, %v117
    %v128 = vpack.c.b16 %v120, %v119
    %137 = vmatpush.bf16.msra.mxu0 %v128
    %138 = vmatpush.bf16.msra.mxu0 %v127
    %139 = vmatpush.bf16.msra.mxu0 %v126
    %140 = vmatpush.bf16.msra.mxu0 %v125
    %141 = vmatpush.bf16.msra.mxu0 %v124
    %142 = vmatpush.bf16.msra.mxu0 %v123
    %143 = vmatpush.bf16.msra.mxu0 %v122
    %144 = vmatpush.bf16.msra.mxu0 %v121
    %145 = vmatmul.bf16.gmra.mxu0 %v70
    %v146 = vpop.f32.mrf.mxu0
    %v147 = vadd.f32 %v88, %v146
    %v148 = vpop.f32.mrf.mxu0
    %149 = vdwg.mxu0
    %v150 = vmax.f32 %v147, 0.0
    %v151 = vpack.c.bf16 %v150, %v150
    %s152 = scalar_lea.vmem [#allocation2], 64
    %v153 = vld [vmem:[%s152] sm:$0xf]
    %v154 = vld [vmem:[%s152 + $0x4] sm:$0xf]
    %v155 = vld [vmem:[%s152 + $0x8] sm:$0xf]
    %v156 = vld [vmem:[%s152 + $0xc] sm:$0xf]
    %v157 = vld [vmem:[%s152 + $0x10] sm:$0xf]
    %v158 = vld [vmem:[%s152 + $0x14] sm:$0xf]
    %v159 = vld [vmem:[%s152 + $0x18] sm:$0xf]
    %v160 = vld [vmem:[%s152 + $0x1c] sm:$0xf]
    %v161 = vld [vmem:[%s152 + $0x20] sm:$0xf]
    %v162 = vld [vmem:[%s152 + $0x24] sm:$0xf]
    %v163 = vld [vmem:[%s152 + $0x28] sm:$0xf]
    %v164 = vld [vmem:[%s152 + $0x2c] sm:$0xf]
    %v165 = vld [vmem:[%s152 + $0x30] sm:$0xf]
    %v166 = vld [vmem:[%s152 + $0x34] sm:$0xf]
    %v167 = vld [vmem:[%s152 + $0x38] sm:$0xf]
    %v168 = vld [vmem:[%s152 + $0x3c] sm:$0xf]
    %v169 = vld [vmem:[%s4 + $0x2] sm:$0x1]
    %v170 = vperm.slane %v169, 0
    %v187 = vunpack.c.l.b16 %v153
    %v188 = vunpack.c.l.b16 %v154
    %v189 = vunpack.c.l.b16 %v155
    %v190 = vunpack.c.l.b16 %v156
    %v191 = vunpack.c.l.b16 %v157
    %v192 = vunpack.c.l.b16 %v158
    %v193 = vunpack.c.l.b16 %v159
    %v194 = vunpack.c.l.b16 %v160
    %v195 = vunpack.c.l.b16 %v161
    %v196 = vunpack.c.l.b16 %v162
    %v197 = vunpack.c.l.b16 %v163
    %v198 = vunpack.c.l.b16 %v164
    %v199 = vunpack.c.l.b16 %v165
    %v200 = vunpack.c.l.b16 %v166
    %v201 = vunpack.c.l.b16 %v167
    %v202 = vunpack.c.l.b16 %v168
    %v203 = vpack.c.b16 %v188, %v187
    %v204 = vpack.c.b16 %v190, %v189
    %v205 = vpack.c.b16 %v192, %v191
    %v206 = vpack.c.b16 %v194, %v193
    %v207 = vpack.c.b16 %v196, %v195
    %v208 = vpack.c.b16 %v198, %v197
    %v209 = vpack.c.b16 %v200, %v199
    %v210 = vpack.c.b16 %v202, %v201
    %219 = vmatpush.bf16.msra.mxu0 %v210
    %220 = vmatpush.bf16.msra.mxu0 %v209
    %221 = vmatpush.bf16.msra.mxu0 %v208
    %222 = vmatpush.bf16.msra.mxu0 %v207
    %223 = vmatpush.bf16.msra.mxu0 %v206
    %224 = vmatpush.bf16.msra.mxu0 %v205
    %225 = vmatpush.bf16.msra.mxu0 %v204
    %226 = vmatpush.bf16.msra.mxu0 %v203
    %227 = vmatmul.bf16.gmra.mxu0 %v151
    %v228 = vpop.f32.mrf.mxu0
    %v229 = vadd.f32 %v170, %v228
    %v230 = vpop.f32.mrf.mxu0
    %231 = vdwg.mxu0
    %v232 = vmax.f32 %v229, 0.0
    %v233 = vpack.c.bf16 %v232, %v232
    %v234 = vld [vmem:[%s3] sm:$0xf]
    %v235 = vld [vmem:[%s3 + $0x4] sm:$0xf]
    %v236 = vld [vmem:[%s3 + $0x8] sm:$0xf]
    %v237 = vld [vmem:[%s3 + $0xc] sm:$0xf]
    %v238 = vld [vmem:[%s3 + $0x10] sm:$0xf]
    %v239 = vld [vmem:[%s3 + $0x14] sm:$0xf]
    %v240 = vld [vmem:[%s3 + $0x18] sm:$0xf]
    %v241 = vld [vmem:[%s3 + $0x1c] sm:$0xf]
    %v242 = vld [vmem:[%s3 + $0x20] sm:$0xf]
    %v243 = vld [vmem:[%s3 + $0x24] sm:$0xf]
    %v244 = vld [vmem:[%s3 + $0x28] sm:$0xf]
    %v245 = vld [vmem:[%s3 + $0x2c] sm:$0xf]
    %v246 = vld [vmem:[%s3 + $0x30] sm:$0xf]
    %v247 = vld [vmem:[%s3 + $0x34] sm:$0xf]
    %v248 = vld [vmem:[%s3 + $0x38] sm:$0xf]
    %v249 = vld [vmem:[%s3 + $0x3c] sm:$0xf]
    %v250 = vld [vmem:[%s4 + $0x3] sm:$0x1]
    %v251 = vperm.slane %v250, 0
    %v268 = vunpack.c.l.b16 %v234
    %v269 = vunpack.c.l.b16 %v235
    %v270 = vunpack.c.l.b16 %v236
    %v271 = vunpack.c.l.b16 %v237
    %v272 = vunpack.c.l.b16 %v238
    %v273 = vunpack.c.l.b16 %v239
    %v274 = vunpack.c.l.b16 %v240
    %v275 = vunpack.c.l.b16 %v241
    %v276 = vunpack.c.l.b16 %v242
    %v277 = vunpack.c.l.b16 %v243
    %v278 = vunpack.c.l.b16 %v244
    %v279 = vunpack.c.l.b16 %v245
    %v280 = vunpack.c.l.b16 %v246
    %v281 = vunpack.c.l.b16 %v247
    %v282 = vunpack.c.l.b16 %v248
    %v283 = vunpack.c.l.b16 %v249
    %v284 = vpack.c.b16 %v269, %v268
    %v285 = vpack.c.b16 %v271, %v270
    %v286 = vpack.c.b16 %v273, %v272
    %v287 = vpack.c.b16 %v275, %v274
    %v288 = vpack.c.b16 %v277, %v276
    %v289 = vpack.c.b16 %v279, %v278
    %v290 = vpack.c.b16 %v281, %v280
    %v291 = vpack.c.b16 %v283, %v282
    %300 = vmatpush.bf16.msra.mxu0 %v291
    %301 = vmatpush.bf16.msra.mxu0 %v290
    %302 = vmatpush.bf16.msra.mxu0 %v289
    %303 = vmatpush.bf16.msra.mxu0 %v288
    %304 = vmatpush.bf16.msra.mxu0 %v287
    %305 = vmatpush.bf16.msra.mxu0 %v286
    %306 = vmatpush.bf16.msra.mxu0 %v285
    %307 = vmatpush.bf16.msra.mxu0 %v284
    %308 = vmatmul.bf16.gmra.mxu0 %v233
    %v309 = vpop.f32.mrf.mxu0
    %v310 = vadd.f32 %v251, %v309
    %v311 = vpop.f32.mrf.mxu0
    %312 = vdwg.mxu0
    %314 = vrot.lane.b32.xlu0 %v310, 127
    %v315 = vpop.permute.xlu0 %314
    %v317 = vadd.f32 %v310, %v315
    %v318 = vmul.f32 %v317, 0.5
    %319 = vset.pattern.permute.xlu0 2
    %320 = vperm.xlu0 %319, %v310
    %v321 = vpop.permute.xlu0 %320
    %v323 = vadd.f32 %v310, %v321
    %325 = vset.pattern.permute.xlu0 0
    %326 = vperm.xlu0 %325, %v318
    %v327 = vpop.permute.xlu0 %326
    %v329 = vsub.f32 %v323, %v327
    %vm330 = vcmask 64512
    %331 = vst.msk [vmem:[%s5] sm:$0xff] %vm330, %v329
    // Predicated region
    $region26: #{cartpole_network_forward.1} parent=1 // pred_check
      _
    $region27: #{cartpole_network_forward.1} parent=1 // pred_check_branch
      %333 = sbr.rel (0) target = $region29
    $region28: #{cartpole_network_forward.1} parent=1 // pred_region
      _
    $region29: #{cartpole_network_forward.1} parent=1 // pred_fallthru
      _
    // Predicated region
    $region30: #{cartpole_network_forward.1} parent=1 // pred_check
      _
    $region31: #{cartpole_network_forward.1} parent=1 // pred_check_branch
      %335 = sbr.rel (0) target = $region33
    $region32: #{cartpole_network_forward.1} parent=1 // pred_region
      _
    $region33: #{cartpole_network_forward.1} parent=1 // pred_fallthru
      _
    %336 = vsyncpa [#allocation3], 1

</llo_original>
